<compile_context>
chip_gen: v5e
topology: v5e:2x2
jax: 0.10.0
libtpu: 0.0.40
codegen_flags: <defaults>
</compile_context>

<pallas_src>
import functools

import jax
import jax.numpy as jnp
from jax.experimental import pallas as pl
from jax.experimental.pallas import tpu as pltpu


# ----------------------------------------------------------------------------
# Fused conv + BN + ReLU kernel: one (TR*Wp, Cout) output slab per grid step.
# ----------------------------------------------------------------------------
def _conv_bn_relu_kernel(x_ref, w_ref, bias_ref, o_ref, *, K, Wp, dil):
    # x_ref:    (1, 1, win_pad, K*Cin) bf16  halo'd row window, dx taps folded
    #                                        into the channel dim.
    # w_ref:    (K, K*Cin, Cout_p)     bf16  BN scale already folded in.
    # bias_ref: (1, Cout_p)            f32   folded BN shift.
    # o_ref:    (1, 1, M, Cout_p)      f32   M = TR*Wp (halo cols included;
    #                                        dropped by the wrapper).
    M = o_ref.shape[2]

    # Unrolled chain of K MXU matmuls (one per kernel row dy), each with
    # contraction depth K*Cin.  All slice starts are static.
    acc = jnp.dot(x_ref[0, 0, 0:M, :], w_ref[0],
                  preferred_element_type=jnp.float32)
    for dy in range(1, K):
        start = dy * dil * Wp
        acc += jnp.dot(x_ref[0, 0, start:start + M, :], w_ref[dy],
                       preferred_element_type=jnp.float32)

    # f32 epilogue (folded-BN shift + ReLU), one lane-dense full-block store.
    o_ref[0, 0] = jnp.maximum(acc + bias_ref[...], 0.0).astype(o_ref.dtype)


# ----------------------------------------------------------------------------
# Wrapper
# ----------------------------------------------------------------------------
def _cdiv(a, b):
    return -(-a // b)


def _round_up(x, m):
    return _cdiv(x, m) * m


def _pick_row_tile(hout, wp, cout_pad, *, m_target=256, acc_budget=128 * 1024):
    """Row-tile size: M = TR*Wp >= ~m_target rows when possible, f32 acc within
    acc_budget; cdiv grid with a rebalanced (not degenerate) tail tile."""
    cap = max(1, acc_budget // (wp * cout_pad * 4))
    target = max(1, _cdiv(m_target, wp))
    tr = max(1, min(hout, cap, target))
    n_tiles = _cdiv(hout, tr)
    tr = _cdiv(hout, n_tiles)          # rebalance so the tail tile is not waste
    return tr, n_tiles


def basic_conv2d(x_nchw, w_hwio, bn_scale, bn_bias, *, stride=1, padding=0,
                 dilation=1):
    """Fused Conv2d(KxK, stride=1, bias=False) + BatchNorm2d(folded) + ReLU.

    x_nchw:  (N, Cin, H, W) f32   (PyTorch layout)
    w_hwio:  (K, K, Cin, Cout) f32
    bn_scale/bn_bias: (Cout,) f32  (gamma/sqrt(var+eps), beta - mean*scale)
    returns (N, Cout, Hout, Wout) f32
    """
    assert stride == 1, "TODO(synk): stride != 1 not implemented"
    x = jnp.transpose(x_nchw, (0, 2, 3, 1)).astype(jnp.float32)     # NHWC
    N, H, W, Cin = x.shape
    KH, KW, wcin, Cout = w_hwio.shape
    assert KH == KW and wcin == Cin, "square kernels, matching Cin only"
    K, p, d = KH, padding, dilation

    Hout = H + 2 * p - d * (K - 1)
    Wout = W + 2 * p - d * (K - 1)
    assert Hout > 0 and Wout > 0
    Wp = W + 2 * p
    halo = (K - 1) * d

    # Lane-dense output channels.
    Cout_p = _round_up(Cout, 128)

    TR, n_tiles = _pick_row_tile(Hout, Wp, Cout_p)
    Hout_pad = TR * n_tiles            # >= Hout; tail rows dropped afterwards
    M = TR * Wp                        # flattened rows per output slab

    # --- Pad the image so every shifted read below stays in bounds ----------
    L_wide = (Hout_pad + halo) * Wp    # flattened length of the dx-concat view
    Hp_pad = _cdiv(L_wide + halo, Wp)  # padded-image rows needed
    xp = jnp.pad(x, ((0, 0), (p, Hp_pad - p - H), (p, p), (0, 0)))
    xp_flat = xp.reshape(N, Hp_pad * Wp, Cin).astype(jnp.bfloat16)

    # --- Fold the K dx-taps into the channel dim (deep MXU contraction) -----
    x_wide = jnp.concatenate(
        [xp_flat[:, j * d:j * d + L_wide, :] for j in range(K)], axis=-1)
    KCin = K * Cin

    # --- Pre-extract overlapping (halo'd) row-tile windows ------------------
    win = (TR + halo) * Wp
    win_pad = _round_up(win, 8)
    if win_pad > win:                  # slack rows so the gather stays in bounds
        x_wide = jnp.pad(x_wide, ((0, 0), (0, win_pad - win), (0, 0)))
    idx = jnp.arange(n_tiles)[:, None] * M + jnp.arange(win_pad)[None, :]
    x_tiles = x_wide[:, idx, :]        # (N, n_tiles, win_pad, K*Cin) bf16

    # --- Weights: fold BN scale in f32, concat dx taps, cast to bf16 --------
    w_f32 = (w_hwio.astype(jnp.float32)
             * bn_scale.astype(jnp.float32)[None, None, None, :])
    w_flat = w_f32.reshape(K, KCin, Cout)
    bias = bn_bias.reshape(1, Cout).astype(jnp.float32)
    if Cout_p > Cout:
        w_flat = jnp.pad(w_flat, ((0, 0), (0, 0), (0, Cout_p - Cout)))
        bias = jnp.pad(bias, ((0, 0), (0, Cout_p - Cout)))
    w_flat = w_flat.astype(jnp.bfloat16)

    kernel = functools.partial(_conv_bn_relu_kernel, K=K, Wp=Wp, dil=d)

    out = pl.pallas_call(
        kernel,
        out_shape=jax.ShapeDtypeStruct((N, n_tiles, M, Cout_p), jnp.float32),
        grid_spec=pltpu.PrefetchScalarGridSpec(
            num_scalar_prefetch=0,
            grid=(N, n_tiles),
            in_specs=[
                # Halo'd row-tile window (double-buffered by the pipeline).
                pl.BlockSpec((1, 1, win_pad, KCin), lambda n, t: (n, t, 0, 0)),
                # Grid-invariant weights / BN bias (fetched once, reused).
                pl.BlockSpec((K, KCin, Cout_p), lambda n, t: (0, 0, 0)),
                pl.BlockSpec((1, Cout_p), lambda n, t: (0, 0)),
            ],
            out_specs=pl.BlockSpec((1, 1, M, Cout_p), lambda n, t: (n, t, 0, 0)),
        ),
        compiler_params=pltpu.CompilerParams(
            dimension_semantics=("parallel", "parallel"),
        ),
    )(x_tiles, w_flat, bias)

    # Drop halo columns / tail rows / channel padding; back to NCHW.
    out = out.reshape(N, Hout_pad, Wp, Cout_p)[:, :Hout, :Wout, :Cout]
    return jnp.transpose(out, (0, 3, 1, 2))


# ----------------------------------------------------------------------------
# Pure-JAX reference (same bf16 inputs / f32 accumulation, BN scale folded the
# same way) for validation.
# ----------------------------------------------------------------------------
def _reference(x_nchw, w_hwio, scale, bias, padding, dilation):
    x = jnp.transpose(x_nchw, (0, 2, 3, 1)).astype(jnp.bfloat16)
    w = (w_hwio.astype(jnp.float32)
         * scale[None, None, None, :]).astype(jnp.bfloat16)
    y = jax.lax.conv_general_dilated(
        x, w, window_strides=(1, 1),
        padding=[(padding, padding), (padding, padding)],
        rhs_dilation=(dilation, dilation),
        dimension_numbers=("NHWC", "HWIO", "NHWC"),
        preferred_element_type=jnp.float32)
    y = jnp.maximum(y + bias[None, None, None, :], 0.0)
    return jnp.transpose(y, (0, 3, 1, 2))


def _make_case(key, N, Cin, Cout, H, W, K):
    k1, k2, k3, k4, k5, k6 = jax.random.split(key, 6)
    eps = 1e-5
    x = jax.random.normal(k1, (N, Cin, H, W), jnp.float32)
    w = jax.random.normal(k2, (K, K, Cin, Cout), jnp.float32) / jnp.sqrt(
        float(K * K * Cin))
    gamma = 1.0 + 0.1 * jax.random.normal(k3, (Cout,), jnp.float32)
    beta = 0.1 * jax.random.normal(k4, (Cout,), jnp.float32)
    run_mean = 0.1 * jax.random.normal(k5, (Cout,), jnp.float32)
    run_var = 0.9 + 0.1 * jnp.abs(jax.random.normal(k6, (Cout,), jnp.float32))
    scale = gamma / jnp.sqrt(run_var + eps)       # fold BN (inference mode)
    bias = beta - run_mean * scale
    return x, w, scale, bias


if __name__ == "__main__":
    key = jax.random.PRNGKey(0)
    k_a, k_b = jax.random.split(key, 2)

    # Case 1: CGNet-style BasicConv2d(64, 128, kernel_size=3, padding=1).
    N, Cin, Cout, H, W, K, pad, dil = 2, 64, 128, 16, 16, 3, 1, 1
    x, w, scale, bias = _make_case(k_a, N, Cin, Cout, H, W, K)
    fwd = jax.jit(functools.partial(basic_conv2d, padding=pad, dilation=dil))
    out = jax.block_until_ready(fwd(x, w, scale, bias))
    assert out.shape == (N, Cout, H, W), out.shape
    assert out.dtype == jnp.float32
    assert bool(jnp.all(jnp.isfinite(out)))
    ref = _reference(x, w, scale, bias, pad, dil)
    err1 = float(jnp.max(jnp.abs(out - ref)))
    assert err1 < 1e-2, f"case1 max abs error vs reference: {err1}"

    # Case 2: non-128 Cout + dilation (exercises channel padding / dil path).
    N2, Cin2, Cout2, H2, W2, K2, pad2, dil2 = 2, 32, 96, 14, 14, 3, 2, 2
    x2, w2, scale2, bias2 = _make_case(k_b, N2, Cin2, Cout2, H2, W2, K2)
    fwd2 = jax.jit(functools.partial(basic_conv2d, padding=pad2, dilation=dil2))
    out2 = jax.block_until_ready(fwd2(x2, w2, scale2, bias2))
    assert out2.shape == (N2, Cout2, H2, W2), out2.shape
    assert bool(jnp.all(jnp.isfinite(out2)))
    ref2 = _reference(x2, w2, scale2, bias2, pad2, dil2)
    err2 = float(jnp.max(jnp.abs(out2 - ref2)))
    assert err2 < 1e-2, f"case2 max abs error vs reference: {err2}"

    print("KERNEL_OK")
</pallas_src>

<mosaic_0001>
module attributes {stable_mosaic.version = 11 : i64} {
  func.func @_conv_bn_relu_kernel(%arg0: i32, %arg1: i32, %arg2: memref<1x1x184x192xbf16, #tpu.memory_space<vmem>>, %arg3: memref<3x192x128xbf16, #tpu.memory_space<vmem>>, %arg4: memref<1x128xf32, #tpu.memory_space<vmem>>, %arg5: memref<1x1x144x128xf32, #tpu.memory_space<vmem>>) attributes {dimension_semantics = [#tpu.dimension_semantics<parallel>, #tpu.dimension_semantics<parallel>], iteration_bounds = array<i64: 2, 2>, scalar_prefetch = 0 : i64, scratch_operands = 0 : i64, tpu.core_type = #tpu.core_type<tc>, window_params = [{transform_indices = @transform_0, window_bounds = array<i64: 1, 1, 184, 192>}, {pipeline_mode = #tpu.pipeline_mode<synchronous>, transform_indices = @transform_1, window_bounds = array<i64: 3, 192, 128>}, {pipeline_mode = #tpu.pipeline_mode<synchronous>, transform_indices = @transform_2, window_bounds = array<i64: 1, 128>}, {transform_indices = @transform_3, window_bounds = array<i64: 1, 1, 144, 128>}]} {
    %c0 = arith.constant 0 : index
    %c0_0 = arith.constant 0 : index
    %c0_1 = arith.constant 0 : index
    %c0_2 = arith.constant 0 : index
    %0 = vector.load %arg2[%c0, %c0_0, %c0_1, %c0_2] : memref<1x1x184x192xbf16, #tpu.memory_space<vmem>>, vector<1x1x144x192xbf16>
    %1 = vector.shape_cast %0 : vector<1x1x144x192xbf16> to vector<144x192xbf16>
    %c0_3 = arith.constant 0 : index
    %c0_4 = arith.constant 0 : index
    %c0_5 = arith.constant 0 : index
    %2 = vector.load %arg3[%c0_3, %c0_4, %c0_5] : memref<3x192x128xbf16, #tpu.memory_space<vmem>>, vector<1x192x128xbf16>
    %3 = vector.shape_cast %2 : vector<1x192x128xbf16> to vector<192x128xbf16>
    %cst = arith.constant dense<0.000000e+00> : vector<144x128xf32>
    %4 = tpu.matmul %1, %3, %cst {dimension_numbers = #tpu.dot_dimension_numbers<[1], [0], [0], [1], [0, 0, 1, 1], [], []>} : vector<144x192xbf16>, vector<192x128xbf16>, vector<144x128xf32> -> vector<144x128xf32>
    %c0_6 = arith.constant 0 : index
    %c0_7 = arith.constant 0 : index
    %c18 = arith.constant 18 : index
    %c0_8 = arith.constant 0 : index
    %5 = vector.load %arg2[%c0_6, %c0_7, %c18, %c0_8] : memref<1x1x184x192xbf16, #tpu.memory_space<vmem>>, vector<1x1x144x192xbf16>
    %6 = vector.shape_cast %5 : vector<1x1x144x192xbf16> to vector<144x192xbf16>
    %c1 = arith.constant 1 : index
    %c0_9 = arith.constant 0 : index
    %c0_10 = arith.constant 0 : index
    %7 = vector.load %arg3[%c1, %c0_9, %c0_10] : memref<3x192x128xbf16, #tpu.memory_space<vmem>>, vector<1x192x128xbf16>
    %8 = vector.shape_cast %7 : vector<1x192x128xbf16> to vector<192x128xbf16>
    %cst_11 = arith.constant dense<0.000000e+00> : vector<144x128xf32>
    %9 = tpu.matmul %6, %8, %cst_11 {dimension_numbers = #tpu.dot_dimension_numbers<[1], [0], [0], [1], [0, 0, 1, 1], [], []>} : vector<144x192xbf16>, vector<192x128xbf16>, vector<144x128xf32> -> vector<144x128xf32>
    %10 = arith.addf %4, %9 : vector<144x128xf32>
    %c0_12 = arith.constant 0 : index
    %c0_13 = arith.constant 0 : index
    %c36 = arith.constant 36 : index
    %c0_14 = arith.constant 0 : index
    %11 = vector.load %arg2[%c0_12, %c0_13, %c36, %c0_14] : memref<1x1x184x192xbf16, #tpu.memory_space<vmem>>, vector<1x1x144x192xbf16>
    %12 = vector.shape_cast %11 : vector<1x1x144x192xbf16> to vector<144x192xbf16>
    %c2 = arith.constant 2 : index
    %c0_15 = arith.constant 0 : index
    %c0_16 = arith.constant 0 : index
    %13 = vector.load %arg3[%c2, %c0_15, %c0_16] : memref<3x192x128xbf16, #tpu.memory_space<vmem>>, vector<1x192x128xbf16>
    %14 = vector.shape_cast %13 : vector<1x192x128xbf16> to vector<192x128xbf16>
    %cst_17 = arith.constant dense<0.000000e+00> : vector<144x128xf32>
    %15 = tpu.matmul %12, %14, %cst_17 {dimension_numbers = #tpu.dot_dimension_numbers<[1], [0], [0], [1], [0, 0, 1, 1], [], []>} : vector<144x192xbf16>, vector<192x128xbf16>, vector<144x128xf32> -> vector<144x128xf32>
    %16 = arith.addf %10, %15 : vector<144x128xf32>
    %c0_18 = arith.constant 0 : index
    %c0_19 = arith.constant 0 : index
    %17 = vector.load %arg4[%c0_18, %c0_19] : memref<1x128xf32, #tpu.memory_space<vmem>>, vector<1x128xf32>
    %18 = vector.broadcast %17 : vector<1x128xf32> to vector<144x128xf32>
    %19 = arith.addf %16, %18 : vector<144x128xf32>
    %cst_20 = arith.constant 0.000000e+00 : f32
    %20 = vector.broadcast %cst_20 : f32 to vector<144x128xf32>
    %21 = arith.maximumf %19, %20 : vector<144x128xf32>
    %c0_21 = arith.constant 0 : index
    %c0_22 = arith.constant 0 : index
    %c0_23 = arith.constant 0 : index
    %c0_24 = arith.constant 0 : index
    %22 = vector.load %arg5[%c0_21, %c0_22, %c0_23, %c0_24] : memref<1x1x144x128xf32, #tpu.memory_space<vmem>>, vector<1x1x144x128xf32>
    %23 = vector.shape_cast %22 : vector<1x1x144x128xf32> to vector<144x128xf32>
    %24 = vector.shape_cast %21 : vector<144x128xf32> to vector<1x1x144x128xf32>
    tpu.vector_store %arg5[%c0_21, %c0_22, %c0_23, %c0_24], %24 {strides = array<i32>} : memref<1x1x144x128xf32, #tpu.memory_space<vmem>>, vector<1x1x144x128xf32>,
    return
  }
  func.func @transform_0(%arg0: i32, %arg1: i32) -> (i32, i32, i32, i32) {
    %c0_i32 = arith.constant 0 : i32
    %c0_i32_0 = arith.constant 0 : i32
    %c0_i32_1 = arith.constant 0 : i32
    return %arg0, %arg1, %c0_i32, %c0_i32_0 : i32, i32, i32, i32
  }
  func.func @transform_1(%arg0: i32, %arg1: i32) -> (i32, i32, i32) {
    %c0_i32 = arith.constant 0 : i32
    %c0_i32_0 = arith.constant 0 : i32
    %c0_i32_1 = arith.constant 0 : i32
    %c0_i32_2 = arith.constant 0 : i32
    return %c0_i32, %c0_i32_0, %c0_i32_1 : i32, i32, i32
  }
  func.func @transform_2(%arg0: i32, %arg1: i32) -> (i32, i32) {
    %c0_i32 = arith.constant 0 : i32
    %c0_i32_0 = arith.constant 0 : i32
    %c0_i32_1 = arith.constant 0 : i32
    return %c0_i32, %c0_i32_0 : i32, i32
  }
  func.func @transform_3(%arg0: i32, %arg1: i32) -> (i32, i32, i32, i32) {
    %c0_i32 = arith.constant 0 : i32
    %c0_i32_0 = arith.constant 0 : i32
    %c0_i32_1 = arith.constant 0 : i32
    return %arg0, %arg1, %c0_i32, %c0_i32_0 : i32, i32, i32, i32
  }
}

</mosaic_0001>

<llo_original>
// kernel: basic_conv2d.1
$region0: #{basic_conv2d.1}
  #allocation0 [shape = 'u32[]', space=smem, size = 0x4, offset = 0x4, fixed_abs, tag = 'smem constant byte address 0x4 - core index']
  #allocation1 [shape = 'u32[72,128]{1,0:T(1,128)}', space=vmem, size = 0x9000, scoped, tag = 'internal scratch']
  %s0 = inlined_call_operand.vmem [shape: bf16[2,2,184,192], index: 0, kind: input, shape index: {}]
  %s1 = inlined_call_operand.vmem [shape: bf16[3,192,128], index: 1, kind: input, shape index: {}]
  %s2 = inlined_call_operand.vmem [shape: f32[1,128], index: 2, kind: input, shape index: {}]
  %s3 = inlined_call_operand.vmem [shape: f32[2,2,144,128], index: 3, kind: output, shape index: {}]
  %s4 = sld [smem:[#allocation0]]
  $region45: #{basic_conv2d.1} parent=0
    _
  %s6 = ssub.s32 1, %s4
  %s7 = scalar_select 0, %s6, %s4
  loop: start=0, step=1, limit=6
  $region2: #{basic_conv2d.1} parent=0 // loop_pre_header
    _
  $region3: #{basic_conv2d.1} parent=0 // loop_header
    %s9 = sphi 0, %s13
    %p10 = scmp.ge.s32.totalorder %s9, 6
    %s16 = sphi 0, %s28
    %s17 = sphi 0, %s24
    %s18 = sphi 0, %s16
    %s19 = sphi 0, %s17
    %s20 = sphi 0, %s18
    %s21 = sphi 0, %s19
    %s33 = sphi 0, %s35
    %s36 = sphi 0, %s33
    %s37 = sphi 0, %s36
    %s53 = sphi 0, %s37
    %s57 = sphi 0, %s57
    %s59 = sphi 0, %s57
    %s60 = sphi 0, %s59
    %s74 = sphi 0, %s60
    %s78 = sphi 0, %s78
    %s80 = sphi 0, %s78
    %s81 = sphi 0, %s80
    %s95 = sphi 0, %s81
    %s103 = sphi 0, %s105
    %s106 = sphi 0, %s103
    %s107 = sphi 0, %s106
    %s123 = sphi 0, %s107
  $region4: #{basic_conv2d.1} parent=0 // loop_header_branch
    %12 = sbr.rel (%p10) target = $region8
  $region5: #{basic_conv2d.1} parent=0 // loop_body
    %s14 = ssub.s32 %s9, 1
    %s15 = ssub.s32 %s9, 2
    %s22 = sadd.s32 1, %s17
    %p23 = scmp.ge.s32.totalorder %s22, 2
    %s24 = scalar_select %p23, 0, %s22
    %s25 = sadd.s32 1, %s16
    %s26 = scalar_select %p23, %s25, %s16
    %p27 = scmp.ge.s32.totalorder %s26, 2
    %s28 = scalar_select %p27, 0, %s26
    %s29 = ssub.s32 %s16, %s28
    %s30 = ssub.s32 %s17, %s24
    %s31 = sor.u32 %s29, %s30
    %p32 = scmp.eq.s32.totalorder %s31, 0
    %s34 = sadd.s32 %s33, 1
    %s35 = scalar_select %p32, %s33, %s34
    %p38 = pneg %p32
    %p39 = scmp.eq.s32.totalorder %s9, 3
    %p40 = por %p38, %p39
    %p41 = scmp.ne.s32.totalorder %s33, %s36
    %p42 = scmp.eq.s32.totalorder %s9, 0
    %p43 = por %p41, %p42
    %p44 = scmp.ne.s32.totalorder %s33, %s36
    %p45 = scmp.eq.s32.totalorder %s14, 3
    %p46 = por %p44, %p45
    %p47 = scmp.ne.s32.totalorder %s36, %s37
    %p48 = scmp.eq.s32.totalorder %s14, 0
    %p49 = por %p47, %p48
    %p50 = scmp.ne.s32.totalorder %s36, %s37
    %p51 = scmp.eq.s32.totalorder %s15, 3
    %p52 = por %p50, %p51
    %p54 = scmp.ne.s32.totalorder %s37, %s53
    %p55 = scmp.eq.s32.totalorder %s15, 0
    %p56 = por %p54, %p55
    %s58 = sadd.s32 %s57, 1
    %p61 = scmp.eq.s32.totalorder %s9, 3
    %p62 = scmp.ne.s32.totalorder %s57, %s59
    %p63 = scmp.eq.s32.totalorder %s9, 0
    %p64 = por %p62, %p63
    %p65 = scmp.ne.s32.totalorder %s57, %s59
    %p66 = scmp.eq.s32.totalorder %s14, 3
    %p67 = por %p65, %p66
    %p68 = scmp.ne.s32.totalorder %s59, %s60
    %p69 = scmp.eq.s32.totalorder %s14, 0
    %p70 = por %p68, %p69
    %p71 = scmp.ne.s32.totalorder %s59, %s60
    %p72 = scmp.eq.s32.totalorder %s15, 3
    %p73 = por %p71, %p72
    %p75 = scmp.ne.s32.totalorder %s60, %s74
    %p76 = scmp.eq.s32.totalorder %s15, 0
    %p77 = por %p75, %p76
    %s79 = sadd.s32 %s78, 1
    %p82 = scmp.eq.s32.totalorder %s9, 3
    %p83 = scmp.ne.s32.totalorder %s78, %s80
    %p84 = scmp.eq.s32.totalorder %s9, 0
    %p85 = por %p83, %p84
    %p86 = scmp.ne.s32.totalorder %s78, %s80
    %p87 = scmp.eq.s32.totalorder %s14, 3
    %p88 = por %p86, %p87
    %p89 = scmp.ne.s32.totalorder %s80, %s81
    %p90 = scmp.eq.s32.totalorder %s14, 0
    %p91 = por %p89, %p90
    %p92 = scmp.ne.s32.totalorder %s80, %s81
    %p93 = scmp.eq.s32.totalorder %s15, 3
    %p94 = por %p92, %p93
    %p96 = scmp.ne.s32.totalorder %s81, %s95
    %p97 = scmp.eq.s32.totalorder %s15, 0
    %p98 = por %p96, %p97
    %s99 = ssub.s32 %s16, %s28
    %s100 = ssub.s32 %s17, %s24
    %s101 = sor.u32 %s99, %s100
    %p102 = scmp.eq.s32.totalorder %s101, 0
    %s104 = sadd.s32 %s103, 1
    %s105 = scalar_select %p102, %s103, %s104
    %p108 = pneg %p102
    %p109 = scmp.eq.s32.totalorder %s9, 3
    %p110 = por %p108, %p109
    %p111 = scmp.ne.s32.totalorder %s103, %s106
    %p112 = scmp.eq.s32.totalorder %s9, 0
    %p113 = por %p111, %p112
    %p114 = scmp.ne.s32.totalorder %s103, %s106
    %p115 = scmp.eq.s32.totalorder %s14, 3
    %p116 = por %p114, %p115
    %p117 = scmp.ne.s32.totalorder %s106, %s107
    %p118 = scmp.eq.s32.totalorder %s14, 0
    %p119 = por %p117, %p118
    %p120 = scmp.ne.s32.totalorder %s106, %s107
    %p121 = scmp.eq.s32.totalorder %s15, 3
    %p122 = por %p120, %p121
    %p124 = scmp.ne.s32.totalorder %s107, %s123
    %p125 = scmp.eq.s32.totalorder %s15, 0
    %p126 = por %p124, %p125
    %p127 = scmp.le.s32.totalorder 1, %s9
    %p128 = scmp.lt.s32.totalorder %s9, 5
    %p129 = pnand %p127, %p128
    %p130 = pneg %p129
    // Predicated region
    $region9: #{basic_conv2d.1} parent=5 // pred_check
      _
    $region10: #{basic_conv2d.1} parent=5 // pred_check_branch
      %132 = sbr.rel (%p129) target = $region12
    $region11: #{basic_conv2d.1} parent=5 // pred_region
      %s133 = ssub.s32 %s9, 1
      // Predicated region
      $region13: #{basic_conv2d.1} parent=11 // pred_check
        %p134 = pneg %p70
      $region14: #{basic_conv2d.1} parent=11 // pred_check_branch
        %136 = sbr.rel (%p134) target = $region16
      $region15: #{basic_conv2d.1} parent=11 // pred_region
        _
      $region16: #{basic_conv2d.1} parent=11 // pred_fallthru
        _
      // Predicated region
      $region17: #{basic_conv2d.1} parent=11 // pred_check
        %p137 = pneg %p91
      $region18: #{basic_conv2d.1} parent=11 // pred_check_branch
        %139 = sbr.rel (%p137) target = $region20
      $region19: #{basic_conv2d.1} parent=11 // pred_region
        _
      $region20: #{basic_conv2d.1} parent=11 // pred_fallthru
        _
    $region12: #{basic_conv2d.1} parent=5 // pred_fallthru
      _
    %p140 = scmp.lt.s32.totalorder %s9, 4
    // Predicated region
    $region21: #{basic_conv2d.1} parent=5 // pred_check
      %p141 = pneg %p140
    $region22: #{basic_conv2d.1} parent=5 // pred_check_branch
      %143 = sbr.rel (%p141) target = $region24
    $region23: #{basic_conv2d.1} parent=5 // pred_region
      // Predicated region
      $region25: #{basic_conv2d.1} parent=23 // pred_check
        %p144 = pneg %p43
      $region26: #{basic_conv2d.1} parent=23 // pred_check_branch
        %146 = sbr.rel (%p144) target = $region28
      $region27: #{basic_conv2d.1} parent=23 // pred_region
        %p147 = scmp.lt.s32.totalorder %s16, 1
        %s148 = scalar_select %p147, %s16, 1
        %p149 = scmp.lt.s32.totalorder %s17, 1
        %s150 = scalar_select %p149, %s17, 1
        %s151 = smul.addr %s150, 46
        %s152 = smul.addr %s148, 92
        %s153 = sadd.s32 %s151, %s152
        %s154 = smul.addr %s153, 4
        %s155 = scalar_lea.vmem %s0, %s154
      $region28: #{basic_conv2d.1} parent=23 // pred_fallthru
        _
    $region24: #{basic_conv2d.1} parent=5 // pred_fallthru
      _
    %p156 = scmp.le.s32.totalorder 1, %s9
    %p157 = scmp.lt.s32.totalorder %s9, 5
    %p158 = pnand %p156, %p157
    %p159 = pneg %p158
    // Predicated region
    $region29: #{basic_conv2d.1} parent=5 // pred_check
      _
    $region30: #{basic_conv2d.1} parent=5 // pred_check_branch
      %161 = sbr.rel (%p158) target = $region32
    $region31: #{basic_conv2d.1} parent=5 // pred_region
      %s162 = ssub.s32 %s9, 1
      %p163 = scmp.lt.s32.totalorder %s18, 1
      %s164 = scalar_select %p163, %s18, 1
      %p165 = scmp.lt.s32.totalorder %s19, 1
      %s166 = scalar_select %p165, %s19, 1
      %s167 = smul.addr %s166, 46
      %s168 = smul.addr %s164, 92
      %s169 = sadd.s32 %s167, %s168
      %s170 = smul.addr %s169, 4
      %s171 = scalar_lea.vmem %s0, %s170
      %p172 = pneg %p49
      %p173 = pneg %p46
      %p174 = pneg %p70
      %p175 = pneg %p67
      %p176 = pneg %p91
      %p177 = pneg %p88
      %p178 = pneg %p119
      %p179 = pneg %p116
      %p180 = scmp.lt.s32.totalorder %s18, 1
      %s181 = scalar_select %p180, %s18, 1
      %p182 = scmp.lt.s32.totalorder %s19, 1
      %s183 = scalar_select %p182, %s19, 1
      %s184 = smul.addr %s183, 18
      %s185 = smul.addr %s181, 36
      %s186 = sadd.s32 %s184, %s185
      %s187 = smul.addr %s186, 8
      %s188 = scalar_lea.vmem %s3, %s187
      %p189 = scmp.lt.s32.totalorder %s18, 1
      %s190 = scalar_select %p189, %s18, 1
      %p191 = scmp.lt.s32.totalorder %s19, 1
      %s192 = scalar_select %p191, %s19, 1
      %s193 = smul.addr %s192, 46
      %s194 = smul.addr %s190, 92
      %s195 = sadd.s32 %s193, %s194
      %s196 = smul.addr %s195, 4
      %s197 = scalar_lea.vmem %s0, %s196
      %p198 = scmp.lt.s32.totalorder %s18, 1
      %s199 = scalar_select %p198, %s18, 1
      %p200 = scmp.lt.s32.totalorder %s19, 1
      %s201 = scalar_select %p200, %s19, 1
      %s202 = smul.addr %s201, 18
      %s203 = smul.addr %s199, 36
      %s204 = sadd.s32 %s202, %s203
      %s205 = smul.addr %s204, 8
      %s206 = scalar_lea.vmem %s3, %s205
      %v208 = vld [vmem:[%s197] sm:$0xff]
      %v209 = vld [vmem:[%s197 + $0x8] sm:$0xff]
      %v210 = vld [vmem:[%s197 + $0x10] sm:$0xff]
      %v211 = vld [vmem:[%s197 + $0x18] sm:$0xff]
      %v212 = vld [vmem:[%s197 + $0x20] sm:$0xff]
      %v213 = vld [vmem:[%s197 + $0x28] sm:$0xff]
      %v214 = vld [vmem:[%s197 + $0x30] sm:$0xff]
      %v215 = vld [vmem:[%s197 + $0x38] sm:$0xff]
      %v216 = vld [vmem:[%s197 + $0x40] sm:$0xff]
      %v217 = vld [vmem:[%s197 + $0x48] sm:$0xff]
      %v218 = vld [vmem:[%s197 + $0x50] sm:$0xff]
      %v219 = vld [vmem:[%s197 + $0x58] sm:$0xff]
      %v220 = vld [vmem:[%s197 + $0x60] sm:$0xff]
      %v221 = vld [vmem:[%s197 + $0x68] sm:$0xff]
      %v222 = vld [vmem:[%s197 + $0x70] sm:$0xff]
      %v223 = vld [vmem:[%s197 + $0x78] sm:$0xff]
      %v224 = vld [vmem:[%s197 + $0x80] sm:$0xff]
      %v225 = vld [vmem:[%s197 + $0x88] sm:$0xff]
      %v226 = vld [vmem:[%s1] sm:$0xf]
      %v227 = vld [vmem:[%s1 + $0x4] sm:$0xf]
      %v228 = vld [vmem:[%s1 + $0x8] sm:$0xf]
      %v229 = vld [vmem:[%s1 + $0xc] sm:$0xf]
      %v230 = vld [vmem:[%s1 + $0x10] sm:$0xf]
      %v231 = vld [vmem:[%s1 + $0x14] sm:$0xf]
      %v232 = vld [vmem:[%s1 + $0x18] sm:$0xf]
      %v233 = vld [vmem:[%s1 + $0x1c] sm:$0xf]
      %v234 = vld [vmem:[%s1 + $0x20] sm:$0xf]
      %v235 = vld [vmem:[%s1 + $0x24] sm:$0xf]
      %v236 = vld [vmem:[%s1 + $0x28] sm:$0xf]
      %v237 = vld [vmem:[%s1 + $0x2c] sm:$0xf]
      %v238 = vld [vmem:[%s1 + $0x30] sm:$0xf]
      %v239 = vld [vmem:[%s1 + $0x34] sm:$0xf]
      %v240 = vld [vmem:[%s1 + $0x38] sm:$0xf]
      %v241 = vld [vmem:[%s1 + $0x3c] sm:$0xf]
      %v242 = vld [vmem:[%s1 + $0x40] sm:$0xf]
      %v243 = vld [vmem:[%s1 + $0x44] sm:$0xf]
      %v244 = vld [vmem:[%s1 + $0x48] sm:$0xf]
      %v245 = vld [vmem:[%s1 + $0x4c] sm:$0xf]
      %v246 = vld [vmem:[%s1 + $0x50] sm:$0xf]
      %v247 = vld [vmem:[%s1 + $0x54] sm:$0xf]
      %v248 = vld [vmem:[%s1 + $0x58] sm:$0xf]
      %v249 = vld [vmem:[%s1 + $0x5c] sm:$0xf]
      %v250 = vld [vmem:[%s197 + $0x10] sm:$0xee]
      %v251 = vld [vmem:[%s197 + $0x90] sm:$0xff]
      %v252 = vld [vmem:[%s197 + $0x98] sm:$0xff]
      %v253 = vld [vmem:[%s197 + $0xa0] sm:$0x11]
      %s254 = scalar_lea.vmem %s1, 96
      %v255 = vld [vmem:[%s254] sm:$0xf]
      %v256 = vld [vmem:[%s254 + $0x4] sm:$0xf]
      %v257 = vld [vmem:[%s254 + $0x8] sm:$0xf]
      %v258 = vld [vmem:[%s254 + $0xc] sm:$0xf]
      %v259 = vld [vmem:[%s254 + $0x10] sm:$0xf]
      %v260 = vld [vmem:[%s254 + $0x14] sm:$0xf]
      %v261 = vld [vmem:[%s254 + $0x18] sm:$0xf]
      %v262 = vld [vmem:[%s254 + $0x1c] sm:$0xf]
      %v263 = vld [vmem:[%s254 + $0x20] sm:$0xf]
      %v264 = vld [vmem:[%s254 + $0x24] sm:$0xf]
      %v265 = vld [vmem:[%s254 + $0x28] sm:$0xf]
      %v266 = vld [vmem:[%s254 + $0x2c] sm:$0xf]
      %v267 = vld [vmem:[%s254 + $0x30] sm:$0xf]
      %v268 = vld [vmem:[%s254 + $0x34] sm:$0xf]
      %v269 = vld [vmem:[%s254 + $0x38] sm:$0xf]
      %v270 = vld [vmem:[%s254 + $0x3c] sm:$0xf]
      %v271 = vld [vmem:[%s254 + $0x40] sm:$0xf]
      %v272 = vld [vmem:[%s254 + $0x44] sm:$0xf]
      %v273 = vld [vmem:[%s254 + $0x48] sm:$0xf]
      %v274 = vld [vmem:[%s254 + $0x4c] sm:$0xf]
      %v275 = vld [vmem:[%s254 + $0x50] sm:$0xf]
      %v276 = vld [vmem:[%s254 + $0x54] sm:$0xf]
      %v277 = vld [vmem:[%s254 + $0x58] sm:$0xf]
      %v278 = vld [vmem:[%s254 + $0x5c] sm:$0xf]
      %v298 = vunpack.c.l.b16 %v250
      %v299 = vunpack.c.h.b16 %v250
      %v300 = vunpack.c.l.b16 %v211
      %v301 = vunpack.c.h.b16 %v211
      %v302 = vunpack.c.l.b16 %v212
      %v303 = vunpack.c.h.b16 %v212
      %v304 = vunpack.c.l.b16 %v213
      %v305 = vunpack.c.h.b16 %v213
      %v306 = vunpack.c.l.b16 %v214
      %v307 = vunpack.c.h.b16 %v214
      %v308 = vunpack.c.l.b16 %v215
      %v309 = vunpack.c.h.b16 %v215
      %v310 = vunpack.c.l.b16 %v216
      %v311 = vunpack.c.h.b16 %v216
      %v312 = vunpack.c.l.b16 %v217
      %v313 = vunpack.c.h.b16 %v217
      %v314 = vunpack.c.l.b16 %v218
      %v315 = vunpack.c.h.b16 %v218
      %v316 = vunpack.c.l.b16 %v219
      %v317 = vunpack.c.h.b16 %v219
      %v318 = vunpack.c.l.b16 %v220
      %v319 = vunpack.c.h.b16 %v220
      %v320 = vunpack.c.l.b16 %v221
      %v321 = vunpack.c.h.b16 %v221
      %v322 = vunpack.c.l.b16 %v222
      %v323 = vunpack.c.h.b16 %v222
      %v324 = vunpack.c.l.b16 %v223
      %v325 = vunpack.c.h.b16 %v223
      %v326 = vunpack.c.l.b16 %v224
      %v327 = vunpack.c.h.b16 %v224
      %v328 = vunpack.c.l.b16 %v225
      %v329 = vunpack.c.h.b16 %v225
      %v330 = vunpack.c.l.b16 %v251
      %v331 = vunpack.c.h.b16 %v251
      %v332 = vunpack.c.l.b16 %v252
      %v333 = vunpack.c.h.b16 %v252
      %v334 = vunpack.c.l.b16 %v253
      %v335 = vunpack.c.h.b16 %v253
      %v336 = vpack.c.b16 %v300, %v298
      %v337 = vpack.c.b16 %v301, %v299
      %v338 = vpack.c.b16 %v304, %v302
      %v339 = vpack.c.b16 %v305, %v303
      %v340 = vpack.c.b16 %v308, %v306
      %v341 = vpack.c.b16 %v309, %v307
      %v342 = vpack.c.b16 %v312, %v310
      %v343 = vpack.c.b16 %v313, %v311
      %v344 = vpack.c.b16 %v316, %v314
      %v345 = vpack.c.b16 %v317, %v315
      %v346 = vpack.c.b16 %v320, %v318
      %v347 = vpack.c.b16 %v321, %v319
      %v348 = vpack.c.b16 %v324, %v322
      %v349 = vpack.c.b16 %v325, %v323
      %v350 = vpack.c.b16 %v328, %v326
      %v351 = vpack.c.b16 %v329, %v327
      %v352 = vpack.c.b16 %v332, %v330
      %v353 = vpack.c.b16 %v333, %v331
      %v354 = vpack.c.b16 %v334, %v334
      %v355 = vpack.c.b16 %v335, %v335
      %vm356 = vcmask 1046528
      %v357 = vrot.slane %v336, 1
      %v358 = vrot.slane %v338, 1
      %v359 = vsel %vm356, %v357, %v358
      %v360 = vrot.slane %v337, 1
      %v361 = vrot.slane %v339, 1
      %v362 = vsel %vm356, %v360, %v361
      %v363 = vrot.slane %v340, 1
      %v364 = vsel %vm356, %v358, %v363
      %v365 = vrot.slane %v341, 1
      %v366 = vsel %vm356, %v361, %v365
      %v367 = vrot.slane %v342, 1
      %v368 = vsel %vm356, %v363, %v367
      %v369 = vrot.slane %v343, 1
      %v370 = vsel %vm356, %v365, %v369
      %v371 = vrot.slane %v344, 1
      %v372 = vsel %vm356, %v367, %v371
      %v373 = vrot.slane %v345, 1
      %v374 = vsel %vm356, %v369, %v373
      %v375 = vrot.slane %v346, 1
      %v376 = vsel %vm356, %v371, %v375
      %v377 = vrot.slane %v347, 1
      %v378 = vsel %vm356, %v373, %v377
      %v379 = vrot.slane %v348, 1
      %v380 = vsel %vm356, %v375, %v379
      %v381 = vrot.slane %v349, 1
      %v382 = vsel %vm356, %v377, %v381
      %v383 = vrot.slane %v350, 1
      %v384 = vsel %vm356, %v379, %v383
      %v385 = vrot.slane %v351, 1
      %v386 = vsel %vm356, %v381, %v385
      %v387 = vrot.slane %v352, 1
      %v388 = vsel %vm356, %v383, %v387
      %v389 = vrot.slane %v353, 1
      %v390 = vsel %vm356, %v385, %v389
      %v391 = vrot.slane %v354, 1
      %v392 = vsel %vm356, %v387, %v391
      %v393 = vrot.slane %v355, 1
      %v394 = vsel %vm356, %v389, %v393
      %v428 = vunpack.c.l.b16 %v255
      %v429 = vunpack.c.l.b16 %v256
      %v430 = vunpack.c.l.b16 %v257
      %v431 = vunpack.c.l.b16 %v258
      %v432 = vunpack.c.l.b16 %v259
      %v433 = vunpack.c.l.b16 %v260
      %v434 = vunpack.c.l.b16 %v261
      %v435 = vunpack.c.l.b16 %v262
      %v436 = vunpack.c.l.b16 %v263
      %v437 = vunpack.c.l.b16 %v264
      %v438 = vunpack.c.l.b16 %v265
      %v439 = vunpack.c.l.b16 %v266
      %v440 = vunpack.c.l.b16 %v267
      %v441 = vunpack.c.l.b16 %v268
      %v442 = vunpack.c.l.b16 %v269
      %v443 = vunpack.c.l.b16 %v270
      %v444 = vunpack.c.l.b16 %v271
      %v445 = vunpack.c.l.b16 %v272
      %v446 = vunpack.c.l.b16 %v273
      %v447 = vunpack.c.l.b16 %v274
      %v448 = vunpack.c.l.b16 %v275
      %v449 = vunpack.c.l.b16 %v276
      %v450 = vunpack.c.l.b16 %v277
      %v451 = vunpack.c.l.b16 %v278
      %v452 = vpack.c.b16 %v429, %v428
      %v453 = vpack.c.b16 %v431, %v430
      %v454 = vpack.c.b16 %v433, %v432
      %v455 = vpack.c.b16 %v435, %v434
      %v456 = vpack.c.b16 %v437, %v436
      %v457 = vpack.c.b16 %v439, %v438
      %v458 = vpack.c.b16 %v441, %v440
      %v459 = vpack.c.b16 %v443, %v442
      %v460 = vpack.c.b16 %v445, %v444
      %v461 = vpack.c.b16 %v447, %v446
      %v462 = vpack.c.b16 %v449, %v448
      %v463 = vpack.c.b16 %v451, %v450
      %vm476 = vcmask 523264
      %v478 = vsel %vm476, %v362, 0
      %v481 = vsel %vm476, %v366, 0
      %v484 = vsel %vm476, %v370, 0
      %v487 = vsel %vm476, %v374, 0
      %v490 = vsel %vm476, %v378, 0
      %v493 = vsel %vm476, %v382, 0
      %v496 = vsel %vm476, %v386, 0
      %v499 = vsel %vm476, %v390, 0
      %v502 = vsel %vm476, %v394, 0
      %504 = vmatpush.bf16.msra.mxu0 %v459
      %505 = vmatpush.bf16.msra.mxu0 %v458
      %506 = vmatpush.bf16.msra.mxu0 %v457
      %507 = vmatpush.bf16.msra.mxu0 %v456
      %508 = vmatpush.bf16.msra.mxu0 %v455
      %509 = vmatpush.bf16.msra.mxu0 %v454
      %510 = vmatpush.bf16.msra.mxu0 %v453
      %511 = vmatpush.bf16.msra.mxu0 %v452
      %512 = vmatmul.bf16.gmra.mxu0 %v359
      %v513 = vpop.f32.mrf.mxu0
      %v514 = vadd.f32 0.0, %v513
      %v515 = vpop.f32.mrf.mxu0
      %v516 = vadd.f32 0.0, %v515
      %517 = vmatmul.bf16.gmra.mxu0 %v364
      %v518 = vpop.f32.mrf.mxu0
      %v519 = vadd.f32 0.0, %v518
      %v520 = vpop.f32.mrf.mxu0
      %v521 = vadd.f32 0.0, %v520
      %522 = vmatmul.bf16.gmra.mxu0 %v368
      %v523 = vpop.f32.mrf.mxu0
      %v524 = vadd.f32 0.0, %v523
      %v525 = vpop.f32.mrf.mxu0
      %v526 = vadd.f32 0.0, %v525
      %527 = vmatmul.bf16.gmra.mxu0 %v372
      %v528 = vpop.f32.mrf.mxu0
      %v529 = vadd.f32 0.0, %v528
      %v530 = vpop.f32.mrf.mxu0
      %v531 = vadd.f32 0.0, %v530
      %532 = vmatmul.bf16.gmra.mxu0 %v376
      %v533 = vpop.f32.mrf.mxu0
      %v534 = vadd.f32 0.0, %v533
      %v535 = vpop.f32.mrf.mxu0
      %v536 = vadd.f32 0.0, %v535
      %537 = vmatmul.bf16.gmra.mxu0 %v380
      %v538 = vpop.f32.mrf.mxu0
      %v539 = vadd.f32 0.0, %v538
      %v540 = vpop.f32.mrf.mxu0
      %v541 = vadd.f32 0.0, %v540
      %542 = vmatmul.bf16.gmra.mxu0 %v384
      %v543 = vpop.f32.mrf.mxu0
      %v544 = vadd.f32 0.0, %v543
      %v545 = vpop.f32.mrf.mxu0
      %v546 = vadd.f32 0.0, %v545
      %547 = vmatmul.bf16.gmra.mxu0 %v388
      %v548 = vpop.f32.mrf.mxu0
      %v549 = vadd.f32 0.0, %v548
      %v550 = vpop.f32.mrf.mxu0
      %v551 = vadd.f32 0.0, %v550
      %552 = vmatmul.bf16.gmra.mxu0 %v392
      %v553 = vpop.f32.mrf.mxu0
      %v554 = vadd.f32 0.0, %v553
      %v555 = vpop.f32.mrf.mxu0
      %v556 = vadd.f32 0.0, %v555
      %557 = vdwg.mxu0
      %558 = vmatpush.bf16.msra.mxu0 0
      %559 = vmatpush.bf16.msra.mxu0 0
      %560 = vmatpush.bf16.msra.mxu0 0
      %561 = vmatpush.bf16.msra.mxu0 0
      %562 = vmatpush.bf16.msra.mxu0 %v463
      %563 = vmatpush.bf16.msra.mxu0 %v462
      %564 = vmatpush.bf16.msra.mxu0 %v461
      %565 = vmatpush.bf16.msra.mxu0 %v460
      %566 = vmatmul.bf16.gmra.mxu0 %v478
      %v567 = vpop.f32.mrf.mxu0
      %v568 = vadd.f32 %v514, %v567
      %v569 = vpop.f32.mrf.mxu0
      %v570 = vadd.f32 %v516, %v569
      %571 = vmatmul.bf16.gmra.mxu0 %v481
      %v572 = vpop.f32.mrf.mxu0
      %v573 = vadd.f32 %v519, %v572
      %v574 = vpop.f32.mrf.mxu0
      %v575 = vadd.f32 %v521, %v574
      %576 = vmatmul.bf16.gmra.mxu0 %v484
      %v577 = vpop.f32.mrf.mxu0
      %v578 = vadd.f32 %v524, %v577
      %v579 = vpop.f32.mrf.mxu0
      %v580 = vadd.f32 %v526, %v579
      %581 = vmatmul.bf16.gmra.mxu0 %v487
      %v582 = vpop.f32.mrf.mxu0
      %v583 = vadd.f32 %v529, %v582
      %v584 = vpop.f32.mrf.mxu0
      %v585 = vadd.f32 %v531, %v584
      %586 = vmatmul.bf16.gmra.mxu0 %v490
      %v587 = vpop.f32.mrf.mxu0
      %v588 = vadd.f32 %v534, %v587
      %v589 = vpop.f32.mrf.mxu0
      %v590 = vadd.f32 %v536, %v589
      %591 = vmatmul.bf16.gmra.mxu0 %v493
      %v592 = vpop.f32.mrf.mxu0
      %v593 = vadd.f32 %v539, %v592
      %v594 = vpop.f32.mrf.mxu0
      %v595 = vadd.f32 %v541, %v594
      %596 = vmatmul.bf16.gmra.mxu0 %v496
      %v597 = vpop.f32.mrf.mxu0
      %v598 = vadd.f32 %v544, %v597
      %v599 = vpop.f32.mrf.mxu0
      %v600 = vadd.f32 %v546, %v599
      %601 = vmatmul.bf16.gmra.mxu0 %v499
      %v602 = vpop.f32.mrf.mxu0
      %v603 = vadd.f32 %v549, %v602
      %v604 = vpop.f32.mrf.mxu0
      %v605 = vadd.f32 %v551, %v604
      %606 = vmatmul.bf16.gmra.mxu0 %v502
      %v607 = vpop.f32.mrf.mxu0
      %v608 = vadd.f32 %v554, %v607
      %v609 = vpop.f32.mrf.mxu0
      %v610 = vadd.f32 %v556, %v609
      %611 = vdwg.mxu0
      %v615 = vunpack.c.l.b16 %v208
      %v616 = vunpack.c.h.b16 %v208
      %v617 = vunpack.c.l.b16 %v209
      %v618 = vunpack.c.h.b16 %v209
      %v619 = vunpack.c.l.b16 %v210
      %v620 = vunpack.c.h.b16 %v210
      %v621 = vpack.c.b16 %v617, %v615
      %v622 = vpack.c.b16 %v618, %v616
      %v623 = vpack.c.b16 %v300, %v619
      %v624 = vpack.c.b16 %v301, %v620
      %v658 = vunpack.c.l.b16 %v226
      %v659 = vunpack.c.l.b16 %v227
      %v660 = vunpack.c.l.b16 %v228
      %v661 = vunpack.c.l.b16 %v229
      %v662 = vunpack.c.l.b16 %v230
      %v663 = vunpack.c.l.b16 %v231
      %v664 = vunpack.c.l.b16 %v232
      %v665 = vunpack.c.l.b16 %v233
      %v666 = vunpack.c.l.b16 %v234
      %v667 = vunpack.c.l.b16 %v235
      %v668 = vunpack.c.l.b16 %v236
      %v669 = vunpack.c.l.b16 %v237
      %v670 = vunpack.c.l.b16 %v238
      %v671 = vunpack.c.l.b16 %v239
      %v672 = vunpack.c.l.b16 %v240
      %v673 = vunpack.c.l.b16 %v241
      %v674 = vunpack.c.l.b16 %v242
      %v675 = vunpack.c.l.b16 %v243
      %v676 = vunpack.c.l.b16 %v244
      %v677 = vunpack.c.l.b16 %v245
      %v678 = vunpack.c.l.b16 %v246
      %v679 = vunpack.c.l.b16 %v247
      %v680 = vunpack.c.l.b16 %v248
      %v681 = vunpack.c.l.b16 %v249
      %v682 = vpack.c.b16 %v659, %v658
      %v683 = vpack.c.b16 %v661, %v660
      %v684 = vpack.c.b16 %v663, %v662
      %v685 = vpack.c.b16 %v665, %v664
      %v686 = vpack.c.b16 %v667, %v666
      %v687 = vpack.c.b16 %v669, %v668
      %v688 = vpack.c.b16 %v671, %v670
      %v689 = vpack.c.b16 %v673, %v672
      %v690 = vpack.c.b16 %v675, %v674
      %v691 = vpack.c.b16 %v677, %v676
      %v692 = vpack.c.b16 %v679, %v678
      %v693 = vpack.c.b16 %v681, %v680
      %v707 = vsel %vm476, %v622, 0
      %v710 = vsel %vm476, %v624, 0
      %v713 = vsel %vm476, %v339, 0
      %v716 = vsel %vm476, %v341, 0
      %v719 = vsel %vm476, %v343, 0
      %v722 = vsel %vm476, %v345, 0
      %v725 = vsel %vm476, %v347, 0
      %v728 = vsel %vm476, %v349, 0
      %v731 = vsel %vm476, %v351, 0
      %733 = vmatpush.bf16.msra.mxu0 %v689
      %734 = vmatpush.bf16.msra.mxu0 %v688
      %735 = vmatpush.bf16.msra.mxu0 %v687
      %736 = vmatpush.bf16.msra.mxu0 %v686
      %737 = vmatpush.bf16.msra.mxu0 %v685
      %738 = vmatpush.bf16.msra.mxu0 %v684
      %739 = vmatpush.bf16.msra.mxu0 %v683
      %740 = vmatpush.bf16.msra.mxu0 %v682
      %741 = vmatmul.bf16.gmra.mxu0 %v621
      %v742 = vpop.f32.mrf.mxu0
      %v743 = vadd.f32 %v568, %v742
      %v744 = vpop.f32.mrf.mxu0
      %v745 = vadd.f32 %v570, %v744
      %746 = vmatmul.bf16.gmra.mxu0 %v623
      %v747 = vpop.f32.mrf.mxu0
      %v748 = vadd.f32 %v573, %v747
      %v749 = vpop.f32.mrf.mxu0
      %v750 = vadd.f32 %v575, %v749
      %751 = vmatmul.bf16.gmra.mxu0 %v338
      %v752 = vpop.f32.mrf.mxu0
      %v753 = vadd.f32 %v578, %v752
      %v754 = vpop.f32.mrf.mxu0
      %v755 = vadd.f32 %v580, %v754
      %756 = vmatmul.bf16.gmra.mxu0 %v340
      %v757 = vpop.f32.mrf.mxu0
      %v758 = vadd.f32 %v583, %v757
      %v759 = vpop.f32.mrf.mxu0
      %v760 = vadd.f32 %v585, %v759
      %761 = vmatmul.bf16.gmra.mxu0 %v342
      %v762 = vpop.f32.mrf.mxu0
      %v763 = vadd.f32 %v588, %v762
      %v764 = vpop.f32.mrf.mxu0
      %v765 = vadd.f32 %v590, %v764
      %766 = vmatmul.bf16.gmra.mxu0 %v344
      %v767 = vpop.f32.mrf.mxu0
      %v768 = vadd.f32 %v593, %v767
      %v769 = vpop.f32.mrf.mxu0
      %v770 = vadd.f32 %v595, %v769
      %771 = vmatmul.bf16.gmra.mxu0 %v346
      %v772 = vpop.f32.mrf.mxu0
      %v773 = vadd.f32 %v598, %v772
      %v774 = vpop.f32.mrf.mxu0
      %v775 = vadd.f32 %v600, %v774
      %776 = vmatmul.bf16.gmra.mxu0 %v348
      %v777 = vpop.f32.mrf.mxu0
      %v778 = vadd.f32 %v603, %v777
      %v779 = vpop.f32.mrf.mxu0
      %v780 = vadd.f32 %v605, %v779
      %781 = vmatmul.bf16.gmra.mxu0 %v350
      %v782 = vpop.f32.mrf.mxu0
      %v783 = vadd.f32 %v608, %v782
      %v784 = vpop.f32.mrf.mxu0
      %v785 = vadd.f32 %v610, %v784
      %786 = vdwg.mxu0
      %787 = vmatpush.bf16.msra.mxu0 0
      %788 = vmatpush.bf16.msra.mxu0 0
      %789 = vmatpush.bf16.msra.mxu0 0
      %790 = vmatpush.bf16.msra.mxu0 0
      %791 = vmatpush.bf16.msra.mxu0 %v693
      %792 = vmatpush.bf16.msra.mxu0 %v692
      %793 = vmatpush.bf16.msra.mxu0 %v691
      %794 = vmatpush.bf16.msra.mxu0 %v690
      %795 = vmatmul.bf16.gmra.mxu0 %v707
      %v796 = vpop.f32.mrf.mxu0
      %v797 = vadd.f32 %v743, %v796
      %v798 = vpop.f32.mrf.mxu0
      %v799 = vadd.f32 %v745, %v798
      %800 = vmatmul.bf16.gmra.mxu0 %v710
      %v801 = vpop.f32.mrf.mxu0
      %v802 = vadd.f32 %v748, %v801
      %v803 = vpop.f32.mrf.mxu0
      %v804 = vadd.f32 %v750, %v803
      %805 = vmatmul.bf16.gmra.mxu0 %v713
      %v806 = vpop.f32.mrf.mxu0
      %v807 = vadd.f32 %v753, %v806
      %v808 = vpop.f32.mrf.mxu0
      %v809 = vadd.f32 %v755, %v808
      %810 = vmatmul.bf16.gmra.mxu0 %v716
      %v811 = vpop.f32.mrf.mxu0
      %v812 = vadd.f32 %v758, %v811
      %v813 = vpop.f32.mrf.mxu0
      %v814 = vadd.f32 %v760, %v813
      %815 = vmatmul.bf16.gmra.mxu0 %v719
      %v816 = vpop.f32.mrf.mxu0
      %v817 = vadd.f32 %v763, %v816
      %v818 = vpop.f32.mrf.mxu0
      %v819 = vadd.f32 %v765, %v818
      %820 = vmatmul.bf16.gmra.mxu0 %v722
      %v821 = vpop.f32.mrf.mxu0
      %v822 = vadd.f32 %v768, %v821
      %v823 = vpop.f32.mrf.mxu0
      %v824 = vadd.f32 %v770, %v823
      %825 = vmatmul.bf16.gmra.mxu0 %v725
      %v826 = vpop.f32.mrf.mxu0
      %v827 = vadd.f32 %v773, %v826
      %v828 = vpop.f32.mrf.mxu0
      %v829 = vadd.f32 %v775, %v828
      %830 = vmatmul.bf16.gmra.mxu0 %v728
      %v831 = vpop.f32.mrf.mxu0
      %v832 = vadd.f32 %v778, %v831
      %v833 = vpop.f32.mrf.mxu0
      %v834 = vadd.f32 %v780, %v833
      %835 = vmatmul.bf16.gmra.mxu0 %v731
      %v836 = vpop.f32.mrf.mxu0
      %v837 = vadd.f32 %v783, %v836
      %v838 = vpop.f32.mrf.mxu0
      %v839 = vadd.f32 %v785, %v838
      %840 = vdwg.mxu0
      %v841 = vld [vmem:[%s197 + $0x20] sm:$0xcc]
      %v842 = vld [vmem:[%s197 + $0x28] sm:$0xff]
      %v843 = vld [vmem:[%s197 + $0x30] sm:$0xff]
      %v844 = vld [vmem:[%s197 + $0x38] sm:$0xff]
      %v845 = vld [vmem:[%s197 + $0x40] sm:$0xff]
      %v846 = vld [vmem:[%s197 + $0x48] sm:$0xff]
      %v847 = vld [vmem:[%s197 + $0x50] sm:$0xff]
      %v848 = vld [vmem:[%s197 + $0x58] sm:$0xff]
      %v849 = vld [vmem:[%s197 + $0x60] sm:$0xff]
      %v850 = vld [vmem:[%s197 + $0x68] sm:$0xff]
      %v851 = vld [vmem:[%s197 + $0x70] sm:$0xff]
      %v852 = vld [vmem:[%s197 + $0x78] sm:$0xff]
      %v853 = vld [vmem:[%s197 + $0x80] sm:$0xff]
      %v854 = vld [vmem:[%s197 + $0x88] sm:$0xff]
      %v855 = vld [vmem:[%s197 + $0x90] sm:$0xff]
      %v856 = vld [vmem:[%s197 + $0x98] sm:$0xff]
      %v857 = vld [vmem:[%s197 + $0xa0] sm:$0xff]
      %v858 = vld [vmem:[%s197 + $0xa8] sm:$0xff]
      %v859 = vld [vmem:[%s197 + $0xb0] sm:$0x33]
      %s860 = scalar_lea.vmem %s1, 192
      %v861 = vld [vmem:[%s860] sm:$0xf]
      %v862 = vld [vmem:[%s860 + $0x4] sm:$0xf]
      %v863 = vld [vmem:[%s860 + $0x8] sm:$0xf]
      %v864 = vld [vmem:[%s860 + $0xc] sm:$0xf]
      %v865 = vld [vmem:[%s860 + $0x10] sm:$0xf]
      %v866 = vld [vmem:[%s860 + $0x14] sm:$0xf]
      %v867 = vld [vmem:[%s860 + $0x18] sm:$0xf]
      %v868 = vld [vmem:[%s860 + $0x1c] sm:$0xf]
      %v869 = vld [vmem:[%s860 + $0x20] sm:$0xf]
      %v870 = vld [vmem:[%s860 + $0x24] sm:$0xf]
      %v871 = vld [vmem:[%s860 + $0x28] sm:$0xf]
      %v872 = vld [vmem:[%s860 + $0x2c] sm:$0xf]
      %v873 = vld [vmem:[%s860 + $0x30] sm:$0xf]
      %v874 = vld [vmem:[%s860 + $0x34] sm:$0xf]
      %v875 = vld [vmem:[%s860 + $0x38] sm:$0xf]
      %v876 = vld [vmem:[%s860 + $0x3c] sm:$0xf]
      %v877 = vld [vmem:[%s860 + $0x40] sm:$0xf]
      %v878 = vld [vmem:[%s860 + $0x44] sm:$0xf]
      %v879 = vld [vmem:[%s860 + $0x48] sm:$0xf]
      %v880 = vld [vmem:[%s860 + $0x4c] sm:$0xf]
      %v881 = vld [vmem:[%s860 + $0x50] sm:$0xf]
      %v882 = vld [vmem:[%s860 + $0x54] sm:$0xf]
      %v883 = vld [vmem:[%s860 + $0x58] sm:$0xf]
      %v884 = vld [vmem:[%s860 + $0x5c] sm:$0xf]
      %v904 = vunpack.c.l.b16 %v841
      %v905 = vunpack.c.h.b16 %v841
      %v906 = vunpack.c.l.b16 %v842
      %v907 = vunpack.c.h.b16 %v842
      %v908 = vunpack.c.l.b16 %v843
      %v909 = vunpack.c.h.b16 %v843
      %v910 = vunpack.c.l.b16 %v844
      %v911 = vunpack.c.h.b16 %v844
      %v912 = vunpack.c.l.b16 %v845
      %v913 = vunpack.c.h.b16 %v845
      %v914 = vunpack.c.l.b16 %v846
      %v915 = vunpack.c.h.b16 %v846
      %v916 = vunpack.c.l.b16 %v847
      %v917 = vunpack.c.h.b16 %v847
      %v918 = vunpack.c.l.b16 %v848
      %v919 = vunpack.c.h.b16 %v848
      %v920 = vunpack.c.l.b16 %v849
      %v921 = vunpack.c.h.b16 %v849
      %v922 = vunpack.c.l.b16 %v850
      %v923 = vunpack.c.h.b16 %v850
      %v924 = vunpack.c.l.b16 %v851
      %v925 = vunpack.c.h.b16 %v851
      %v926 = vunpack.c.l.b16 %v852
      %v927 = vunpack.c.h.b16 %v852
      %v928 = vunpack.c.l.b16 %v853
      %v929 = vunpack.c.h.b16 %v853
      %v930 = vunpack.c.l.b16 %v854
      %v931 = vunpack.c.h.b16 %v854
      %v932 = vunpack.c.l.b16 %v855
      %v933 = vunpack.c.h.b16 %v855
      %v934 = vunpack.c.l.b16 %v856
      %v935 = vunpack.c.h.b16 %v856
      %v936 = vunpack.c.l.b16 %v857
      %v937 = vunpack.c.h.b16 %v857
      %v938 = vunpack.c.l.b16 %v858
      %v939 = vunpack.c.h.b16 %v858
      %v940 = vunpack.c.l.b16 %v859
      %v941 = vunpack.c.h.b16 %v859
      %v942 = vpack.c.b16 %v906, %v904
      %v943 = vpack.c.b16 %v907, %v905
      %v944 = vpack.c.b16 %v910, %v908
      %v945 = vpack.c.b16 %v911, %v909
      %v946 = vpack.c.b16 %v914, %v912
      %v947 = vpack.c.b16 %v915, %v913
      %v948 = vpack.c.b16 %v918, %v916
      %v949 = vpack.c.b16 %v919, %v917
      %v950 = vpack.c.b16 %v922, %v920
      %v951 = vpack.c.b16 %v923, %v921
      %v952 = vpack.c.b16 %v926, %v924
      %v953 = vpack.c.b16 %v927, %v925
      %v954 = vpack.c.b16 %v930, %v928
      %v955 = vpack.c.b16 %v931, %v929
      %v956 = vpack.c.b16 %v934, %v932
      %v957 = vpack.c.b16 %v935, %v933
      %v958 = vpack.c.b16 %v938, %v936
      %v959 = vpack.c.b16 %v939, %v937
      %v960 = vpack.c.b16 %v940, %v940
      %v961 = vpack.c.b16 %v941, %v941
      %vm962 = vcmask 1045504
      %v963 = vrot.slane %v942, 2
      %v964 = vrot.slane %v944, 2
      %v965 = vsel %vm962, %v963, %v964
      %v966 = vrot.slane %v943, 2
      %v967 = vrot.slane %v945, 2
      %v968 = vsel %vm962, %v966, %v967
      %v969 = vrot.slane %v946, 2
      %v970 = vsel %vm962, %v964, %v969
      %v971 = vrot.slane %v947, 2
      %v972 = vsel %vm962, %v967, %v971
      %v973 = vrot.slane %v948, 2
      %v974 = vsel %vm962, %v969, %v973
      %v975 = vrot.slane %v949, 2
      %v976 = vsel %vm962, %v971, %v975
      %v977 = vrot.slane %v950, 2
      %v978 = vsel %vm962, %v973, %v977
      %v979 = vrot.slane %v951, 2
      %v980 = vsel %vm962, %v975, %v979
      %v981 = vrot.slane %v952, 2
      %v982 = vsel %vm962, %v977, %v981
      %v983 = vrot.slane %v953, 2
      %v984 = vsel %vm962, %v979, %v983
      %v985 = vrot.slane %v954, 2
      %v986 = vsel %vm962, %v981, %v985
      %v987 = vrot.slane %v955, 2
      %v988 = vsel %vm962, %v983, %v987
      %v989 = vrot.slane %v956, 2
      %v990 = vsel %vm962, %v985, %v989
      %v991 = vrot.slane %v957, 2
      %v992 = vsel %vm962, %v987, %v991
      %v993 = vrot.slane %v958, 2
      %v994 = vsel %vm962, %v989, %v993
      %v995 = vrot.slane %v959, 2
      %v996 = vsel %vm962, %v991, %v995
      %v997 = vrot.slane %v960, 2
      %v998 = vsel %vm962, %v993, %v997
      %v999 = vrot.slane %v961, 2
      %v1000 = vsel %vm962, %v995, %v999
      %v1034 = vunpack.c.l.b16 %v861
      %v1035 = vunpack.c.l.b16 %v862
      %v1036 = vunpack.c.l.b16 %v863
      %v1037 = vunpack.c.l.b16 %v864
      %v1038 = vunpack.c.l.b16 %v865
      %v1039 = vunpack.c.l.b16 %v866
      %v1040 = vunpack.c.l.b16 %v867
      %v1041 = vunpack.c.l.b16 %v868
      %v1042 = vunpack.c.l.b16 %v869
      %v1043 = vunpack.c.l.b16 %v870
      %v1044 = vunpack.c.l.b16 %v871
      %v1045 = vunpack.c.l.b16 %v872
      %v1046 = vunpack.c.l.b16 %v873
      %v1047 = vunpack.c.l.b16 %v874
      %v1048 = vunpack.c.l.b16 %v875
      %v1049 = vunpack.c.l.b16 %v876
      %v1050 = vunpack.c.l.b16 %v877
      %v1051 = vunpack.c.l.b16 %v878
      %v1052 = vunpack.c.l.b16 %v879
      %v1053 = vunpack.c.l.b16 %v880
      %v1054 = vunpack.c.l.b16 %v881
      %v1055 = vunpack.c.l.b16 %v882
      %v1056 = vunpack.c.l.b16 %v883
      %v1057 = vunpack.c.l.b16 %v884
      %v1058 = vpack.c.b16 %v1035, %v1034
      %v1059 = vpack.c.b16 %v1037, %v1036
      %v1060 = vpack.c.b16 %v1039, %v1038
      %v1061 = vpack.c.b16 %v1041, %v1040
      %v1062 = vpack.c.b16 %v1043, %v1042
      %v1063 = vpack.c.b16 %v1045, %v1044
      %v1064 = vpack.c.b16 %v1047, %v1046
      %v1065 = vpack.c.b16 %v1049, %v1048
      %v1066 = vpack.c.b16 %v1051, %v1050
      %v1067 = vpack.c.b16 %v1053, %v1052
      %v1068 = vpack.c.b16 %v1055, %v1054
      %v1069 = vpack.c.b16 %v1057, %v1056
      %v1083 = vsel %vm476, %v968, 0
      %v1086 = vsel %vm476, %v972, 0
      %v1089 = vsel %vm476, %v976, 0
      %v1092 = vsel %vm476, %v980, 0
      %v1095 = vsel %vm476, %v984, 0
      %v1098 = vsel %vm476, %v988, 0
      %v1101 = vsel %vm476, %v992, 0
      %v1104 = vsel %vm476, %v996, 0
      %v1107 = vsel %vm476, %v1000, 0
      %1109 = vmatpush.bf16.msra.mxu0 %v1065
      %1110 = vmatpush.bf16.msra.mxu0 %v1064
      %1111 = vmatpush.bf16.msra.mxu0 %v1063
      %1112 = vmatpush.bf16.msra.mxu0 %v1062
      %1113 = vmatpush.bf16.msra.mxu0 %v1061
      %1114 = vmatpush.bf16.msra.mxu0 %v1060
      %1115 = vmatpush.bf16.msra.mxu0 %v1059
      %1116 = vmatpush.bf16.msra.mxu0 %v1058
      %1117 = vmatmul.bf16.gmra.mxu0 %v965
      %v1118 = vpop.f32.mrf.mxu0
      %v1119 = vadd.f32 0.0, %v1118
      %v1120 = vpop.f32.mrf.mxu0
      %v1121 = vadd.f32 0.0, %v1120
      %1122 = vmatmul.bf16.gmra.mxu0 %v970
      %v1123 = vpop.f32.mrf.mxu0
      %v1124 = vadd.f32 0.0, %v1123
      %v1125 = vpop.f32.mrf.mxu0
      %v1126 = vadd.f32 0.0, %v1125
      %1127 = vmatmul.bf16.gmra.mxu0 %v974
      %v1128 = vpop.f32.mrf.mxu0
      %v1129 = vadd.f32 0.0, %v1128
      %v1130 = vpop.f32.mrf.mxu0
      %v1131 = vadd.f32 0.0, %v1130
      %1132 = vmatmul.bf16.gmra.mxu0 %v978
      %v1133 = vpop.f32.mrf.mxu0
      %v1134 = vadd.f32 0.0, %v1133
      %v1135 = vpop.f32.mrf.mxu0
      %v1136 = vadd.f32 0.0, %v1135
      %1137 = vmatmul.bf16.gmra.mxu0 %v982
      %v1138 = vpop.f32.mrf.mxu0
      %v1139 = vadd.f32 0.0, %v1138
      %v1140 = vpop.f32.mrf.mxu0
      %v1141 = vadd.f32 0.0, %v1140
      %1142 = vmatmul.bf16.gmra.mxu0 %v986
      %v1143 = vpop.f32.mrf.mxu0
      %v1144 = vadd.f32 0.0, %v1143
      %v1145 = vpop.f32.mrf.mxu0
      %v1146 = vadd.f32 0.0, %v1145
      %1147 = vmatmul.bf16.gmra.mxu0 %v990
      %v1148 = vpop.f32.mrf.mxu0
      %v1149 = vadd.f32 0.0, %v1148
      %v1150 = vpop.f32.mrf.mxu0
      %v1151 = vadd.f32 0.0, %v1150
      %1152 = vmatmul.bf16.gmra.mxu0 %v994
      %v1153 = vpop.f32.mrf.mxu0
      %v1154 = vadd.f32 0.0, %v1153
      %v1155 = vpop.f32.mrf.mxu0
      %v1156 = vadd.f32 0.0, %v1155
      %1157 = vmatmul.bf16.gmra.mxu0 %v998
      %v1158 = vpop.f32.mrf.mxu0
      %v1159 = vadd.f32 0.0, %v1158
      %v1160 = vpop.f32.mrf.mxu0
      %v1161 = vadd.f32 0.0, %v1160
      %1162 = vdwg.mxu0
      %1163 = vmatpush.bf16.msra.mxu0 0
      %1164 = vmatpush.bf16.msra.mxu0 0
      %1165 = vmatpush.bf16.msra.mxu0 0
      %1166 = vmatpush.bf16.msra.mxu0 0
      %1167 = vmatpush.bf16.msra.mxu0 %v1069
      %1168 = vmatpush.bf16.msra.mxu0 %v1068
      %1169 = vmatpush.bf16.msra.mxu0 %v1067
      %1170 = vmatpush.bf16.msra.mxu0 %v1066
      %1171 = vmatmul.bf16.gmra.mxu0 %v1083
      %v1172 = vpop.f32.mrf.mxu0
      %v1173 = vadd.f32 %v1119, %v1172
      %v1174 = vpop.f32.mrf.mxu0
      %v1175 = vadd.f32 %v1121, %v1174
      %1176 = vmatmul.bf16.gmra.mxu0 %v1086
      %v1177 = vpop.f32.mrf.mxu0
      %v1178 = vadd.f32 %v1124, %v1177
      %v1179 = vpop.f32.mrf.mxu0
      %v1180 = vadd.f32 %v1126, %v1179
      %1181 = vmatmul.bf16.gmra.mxu0 %v1089
      %v1182 = vpop.f32.mrf.mxu0
      %v1183 = vadd.f32 %v1129, %v1182
      %v1184 = vpop.f32.mrf.mxu0
      %v1185 = vadd.f32 %v1131, %v1184
      %1186 = vmatmul.bf16.gmra.mxu0 %v1092
      %v1187 = vpop.f32.mrf.mxu0
      %v1188 = vadd.f32 %v1134, %v1187
      %v1189 = vpop.f32.mrf.mxu0
      %v1190 = vadd.f32 %v1136, %v1189
      %1191 = vmatmul.bf16.gmra.mxu0 %v1095
      %v1192 = vpop.f32.mrf.mxu0
      %v1193 = vadd.f32 %v1139, %v1192
      %v1194 = vpop.f32.mrf.mxu0
      %v1195 = vadd.f32 %v1141, %v1194
      %1196 = vmatmul.bf16.gmra.mxu0 %v1098
      %v1197 = vpop.f32.mrf.mxu0
      %v1198 = vadd.f32 %v1144, %v1197
      %v1199 = vpop.f32.mrf.mxu0
      %v1200 = vadd.f32 %v1146, %v1199
      %1201 = vmatmul.bf16.gmra.mxu0 %v1101
      %v1202 = vpop.f32.mrf.mxu0
      %v1203 = vadd.f32 %v1149, %v1202
      %v1204 = vpop.f32.mrf.mxu0
      %v1205 = vadd.f32 %v1151, %v1204
      %1206 = vmatmul.bf16.gmra.mxu0 %v1104
      %v1207 = vpop.f32.mrf.mxu0
      %v1208 = vadd.f32 %v1154, %v1207
      %v1209 = vpop.f32.mrf.mxu0
      %v1210 = vadd.f32 %v1156, %v1209
      %1211 = vmatmul.bf16.gmra.mxu0 %v1107
      %v1212 = vpop.f32.mrf.mxu0
      %v1213 = vadd.f32 %v1159, %v1212
      %v1214 = vpop.f32.mrf.mxu0
      %v1215 = vadd.f32 %v1161, %v1214
      %1216 = vdwg.mxu0
      %v1217 = vadd.f32 %v797, %v1173
      %v1218 = vadd.f32 %v799, %v1175
      %v1219 = vadd.f32 %v802, %v1178
      %v1220 = vadd.f32 %v804, %v1180
      %v1221 = vadd.f32 %v807, %v1183
      %v1222 = vadd.f32 %v809, %v1185
      %v1223 = vadd.f32 %v812, %v1188
      %v1224 = vadd.f32 %v814, %v1190
      %v1225 = vadd.f32 %v817, %v1193
      %v1226 = vadd.f32 %v819, %v1195
      %v1227 = vadd.f32 %v822, %v1198
      %v1228 = vadd.f32 %v824, %v1200
      %v1229 = vadd.f32 %v827, %v1203
      %v1230 = vadd.f32 %v829, %v1205
      %v1231 = vadd.f32 %v832, %v1208
      %v1232 = vadd.f32 %v834, %v1210
      %v1233 = vadd.f32 %v837, %v1213
      %v1234 = vadd.f32 %v839, %v1215
      %v1235 = vld [vmem:[%s2] sm:$0x1]
      %v1237 = vperm.slane %v1235, 0
      %v1239 = vadd.f32 %v1217, %v1237
      %v1240 = vadd.f32 %v1218, %v1237
      %v1241 = vadd.f32 %v1219, %v1237
      %v1242 = vadd.f32 %v1220, %v1237
      %v1243 = vadd.f32 %v1221, %v1237
      %v1244 = vadd.f32 %v1222, %v1237
      %v1245 = vadd.f32 %v1223, %v1237
      %v1246 = vadd.f32 %v1224, %v1237
      %v1247 = vadd.f32 %v1225, %v1237
      %v1248 = vadd.f32 %v1226, %v1237
      %v1249 = vadd.f32 %v1227, %v1237
      %v1250 = vadd.f32 %v1228, %v1237
      %v1251 = vadd.f32 %v1229, %v1237
      %v1252 = vadd.f32 %v1230, %v1237
      %v1253 = vadd.f32 %v1231, %v1237
      %v1254 = vadd.f32 %v1232, %v1237
      %v1255 = vadd.f32 %v1233, %v1237
      %v1256 = vadd.f32 %v1234, %v1237
      %v1257 = vmax.f32 %v1239, 0.0
      %v1258 = vmax.f32 %v1240, 0.0
      %v1259 = vmax.f32 %v1241, 0.0
      %v1260 = vmax.f32 %v1242, 0.0
      %v1261 = vmax.f32 %v1243, 0.0
      %v1262 = vmax.f32 %v1244, 0.0
      %v1263 = vmax.f32 %v1245, 0.0
      %v1264 = vmax.f32 %v1246, 0.0
      %v1265 = vmax.f32 %v1247, 0.0
      %v1266 = vmax.f32 %v1248, 0.0
      %v1267 = vmax.f32 %v1249, 0.0
      %v1268 = vmax.f32 %v1250, 0.0
      %v1269 = vmax.f32 %v1251, 0.0
      %v1270 = vmax.f32 %v1252, 0.0
      %v1271 = vmax.f32 %v1253, 0.0
      %v1272 = vmax.f32 %v1254, 0.0
      %v1273 = vmax.f32 %v1255, 0.0
      %v1274 = vmax.f32 %v1256, 0.0
      %1275 = vst [vmem:[%s206] sm:$0xff] %v1257
      %1276 = vst [vmem:[%s206 + $0x8] sm:$0xff] %v1258
      %1277 = vst [vmem:[%s206 + $0x10] sm:$0xff] %v1259
      %1278 = vst [vmem:[%s206 + $0x18] sm:$0xff] %v1260
      %1279 = vst [vmem:[%s206 + $0x20] sm:$0xff] %v1261
      %1280 = vst [vmem:[%s206 + $0x28] sm:$0xff] %v1262
      %1281 = vst [vmem:[%s206 + $0x30] sm:$0xff] %v1263
      %1282 = vst [vmem:[%s206 + $0x38] sm:$0xff] %v1264
      %1283 = vst [vmem:[%s206 + $0x40] sm:$0xff] %v1265
      %1284 = vst [vmem:[%s206 + $0x48] sm:$0xff] %v1266
      %1285 = vst [vmem:[%s206 + $0x50] sm:$0xff] %v1267
      %1286 = vst [vmem:[%s206 + $0x58] sm:$0xff] %v1268
      %1287 = vst [vmem:[%s206 + $0x60] sm:$0xff] %v1269
      %1288 = vst [vmem:[%s206 + $0x68] sm:$0xff] %v1270
      %1289 = vst [vmem:[%s206 + $0x70] sm:$0xff] %v1271
      %1290 = vst [vmem:[%s206 + $0x78] sm:$0xff] %v1272
      %1291 = vst [vmem:[%s206 + $0x80] sm:$0xff] %v1273
      %1292 = vst [vmem:[%s206 + $0x88] sm:$0xff] %v1274
      %p1293 = scmp.lt.s32.totalorder %s18, 1
      %s1294 = scalar_select %p1293, %s18, 1
      %p1295 = scmp.lt.s32.totalorder %s19, 1
      %s1296 = scalar_select %p1295, %s19, 1
      %s1297 = smul.addr %s1296, 18
      %s1298 = smul.addr %s1294, 36
      %s1299 = sadd.s32 %s1297, %s1298
      %s1300 = smul.addr %s1299, 8
      %s1301 = scalar_lea.vmem %s3, %s1300
      // Predicated region
      $region33: #{basic_conv2d.1} parent=31 // pred_check
        %p1302 = pneg %p116
      $region34: #{basic_conv2d.1} parent=31 // pred_check_branch
        %1304 = sbr.rel (%p1302) target = $region36
      $region35: #{basic_conv2d.1} parent=31 // pred_region
        _
      $region36: #{basic_conv2d.1} parent=31 // pred_fallthru
        _
    $region32: #{basic_conv2d.1} parent=5 // pred_fallthru
      _
    %p1305 = scmp.le.s32.totalorder 2, %s9
    // Predicated region
    $region37: #{basic_conv2d.1} parent=5 // pred_check
      %p1306 = pneg %p1305
    $region38: #{basic_conv2d.1} parent=5 // pred_check_branch
      %1308 = sbr.rel (%p1306) target = $region40
    $region39: #{basic_conv2d.1} parent=5 // pred_region
      %s1309 = ssub.s32 %s9, 2
      // Predicated region
      $region41: #{basic_conv2d.1} parent=39 // pred_check
        %p1310 = pneg %p122
      $region42: #{basic_conv2d.1} parent=39 // pred_check_branch
        %1312 = sbr.rel (%p1310) target = $region44
      $region43: #{basic_conv2d.1} parent=39 // pred_region
        %p1313 = scmp.lt.s32.totalorder %s20, 1
        %s1314 = scalar_select %p1313, %s20, 1
        %p1315 = scmp.lt.s32.totalorder %s21, 1
        %s1316 = scalar_select %p1315, %s21, 1
        %s1317 = smul.addr %s1316, 18
        %s1318 = smul.addr %s1314, 36
        %s1319 = sadd.s32 %s1317, %s1318
        %s1320 = smul.addr %s1319, 8
        %s1321 = scalar_lea.vmem %s3, %s1320
      $region44: #{basic_conv2d.1} parent=39 // pred_fallthru
        _
    $region40: #{basic_conv2d.1} parent=5 // pred_fallthru
      _
  $region6: #{basic_conv2d.1} parent=0 // loop_footer
    %s13 = sadd.s32 1, %s9
  $region7: #{basic_conv2d.1} parent=0 // loop_footer_branch
    %8 = sbr.rel target = $region3
  $region8: #{basic_conv2d.1} parent=0 // loop_exit
    _

</llo_original>
